<compile_context>
chip_gen: v7x
topology: tpu7x:2x2x1
jax: 0.10.0
libtpu: 0.0.40
codegen_flags: <defaults>
</compile_context>

<pallas_src>
import functools
import math

import jax
import jax.numpy as jnp
from jax.experimental import pallas as pl
from jax.experimental.pallas import tpu as pltpu


def _round_up(v, m):
    return ((v + m - 1) // m) * m


def _my_loss_kernel(x_ref, y_ref, o_ref, *, n_total, tile_n, label_smooth,
                    gamma, eps):
    i = pl.program_id(0)

    logits = x_ref[...].astype(jnp.float32)          # (tn, C)
    labels = y_ref[...]                              # (tn, 1) int32
    tn, C = logits.shape

    # one_hot via iota-compare (F.one_hot equivalent) + label smoothing.
    col = jax.lax.broadcasted_iota(jnp.int32, (tn, C), 1)
    one_hot = (col == labels).astype(jnp.float32)
    if label_smooth:
        y_s = one_hot * (1.0 - label_smooth) + (label_smooth / C)
    else:
        y_s = one_hot

    # Numerically stable log-softmax: one log + one divide per row (instead
    # of a per-element log and per-element divide).
    m = jnp.max(logits, axis=-1, keepdims=True)
    shifted = logits - m
    e = jnp.exp(shifted)
    s = jnp.sum(e, axis=-1, keepdims=True)
    logp = shifted - jnp.log(s)
    p = e * (1.0 / s)
    # Clamp consistently with the reference clip(p, eps, 1 - eps).
    logp = jnp.clip(logp, math.log(eps), math.log1p(-eps))
    p = jnp.clip(p, eps, 1.0 - eps)

    loss = -y_s * logp                                # (tn, C)
    if gamma:
        loss = loss * jnp.power(1.0 - p, jnp.float32(gamma))

    # Mask rows of the last (partial) batch tile.
    row = i * tile_n + jax.lax.broadcasted_iota(jnp.int32, (tn, 1), 0)
    loss = jnp.where(row < n_total, loss, 0.0)

    # Fold rows into an (8, C) partial-sum slab: pure VPU vector adds. The
    # single full reduce + divide-by-N happen once, in the wrapper.
    o_ref[0] = jnp.sum(loss.reshape(tn // 8, 8, C), axis=0)


def my_loss(x, y, label_smooth=0.06, gamma=0.3, eps=1e-7, tile_n=None):
    """Pallas TPU implementation of MyLoss.forward (reduction='mean')."""
    N, C = x.shape

    if tile_n is None:
        # Per-row VMEM cost estimate: double-buffered x block plus ~4 live
        # (tile_n, C) f32 intermediates (one_hot / e / p / loss).  A 16 MiB
        # budget keeps everything comfortably inside v7x's 64 MiB VMEM and
        # trivially inside v5e/v6e's 128 MiB, while still giving multi-MiB,
        # multi-thousand-row tiles for small/moderate C.
        budget_bytes = 16 << 20
        bytes_per_row = (2 * x.dtype.itemsize + 4 * 4) * C + 64
        tile_n = min(budget_bytes // bytes_per_row, 8192)
    tile_n = min(tile_n, N) if N >= 8 else 8
    tile_n = max(8, (tile_n // 8) * 8)               # multiple of 8 sublanes
    num_blocks = pl.cdiv(N, tile_n)

    y2 = y.astype(jnp.int32).reshape(N, 1)

    kernel = functools.partial(
        _my_loss_kernel, n_total=N, tile_n=tile_n,
        label_smooth=label_smooth, gamma=gamma, eps=eps)

    partials = pl.pallas_call(
        kernel,
        out_shape=jax.ShapeDtypeStruct((num_blocks, 8, C), jnp.float32),
        grid_spec=pltpu.PrefetchScalarGridSpec(
            num_scalar_prefetch=0,
            grid=(num_blocks,),
            in_specs=[
                pl.BlockSpec((tile_n, C), lambda i: (i, 0)),
                pl.BlockSpec((tile_n, 1), lambda i: (i, 0)),
            ],
            out_specs=pl.BlockSpec((1, 8, C), lambda i: (i, 0, 0)),
        ),
        compiler_params=pltpu.CompilerParams(
            # Independent batch tiles -> sharded across both TensorCores on
            # v7x; harmless on single-TC v5e/v6e.
            dimension_semantics=("parallel",),
            vmem_limit_bytes=48 << 20,
        ),
    )(x, y2)

    # One tree reduce + mean outside the kernel.
    return jnp.sum(partials) / jnp.float32(N)


def _ref_loss(x, y, label_smooth=0.06, gamma=0.3, eps=1e-7):
    # Pure-JAX reference mirroring the PyTorch forward.
    N, C = x.shape
    one_hot = jax.nn.one_hot(y, C, dtype=jnp.float32)
    y_s = one_hot * (1.0 - label_smooth) + label_smooth / C
    p = jax.nn.softmax(x.astype(jnp.float32), axis=1)
    p = jnp.clip(p, eps, 1.0 - eps)
    loss = -y_s * jnp.log(p)
    loss = loss * (1.0 - p) ** gamma
    return jnp.mean(jnp.sum(loss, axis=-1))


if __name__ == "__main__":
    key = jax.random.PRNGKey(0)
    kx, ky = jax.random.split(key)

    # Case 1: small natural shape, auto-sized tile.
    N, C = 64, 32
    x = jax.random.normal(kx, (N, C), dtype=jnp.float32)
    y = jax.random.randint(ky, (N,), 0, C, dtype=jnp.int32)
    out = jax.block_until_ready(my_loss(x, y))
    ref = _ref_loss(x, y)
    assert jnp.allclose(out, ref, rtol=1e-5, atol=1e-5), (out, ref)

    # Case 2: batch NOT divisible by the tile -> exercises the masked
    # partial last tile.
    N2 = 20
    x2 = jax.random.normal(kx, (N2, C), dtype=jnp.float32)
    y2 = jax.random.randint(ky, (N2,), 0, C, dtype=jnp.int32)
    out2 = jax.block_until_ready(my_loss(x2, y2, tile_n=8))
    ref2 = _ref_loss(x2, y2)
    assert jnp.allclose(out2, ref2, rtol=1e-5, atol=1e-5), (out2, ref2)

    print("KERNEL_OK")
</pallas_src>

<mosaic_0001>
module attributes {stable_mosaic.version = 11 : i64} {
  func.func @_my_loss_kernel(%arg0: i32, %arg1: memref<64x32xf32, #tpu.memory_space<vmem>>, %arg2: memref<64x1xi32, #tpu.memory_space<vmem>>, %arg3: memref<1x8x32xf32, #tpu.memory_space<vmem>>) attributes {dimension_semantics = [#tpu.dimension_semantics<parallel>], iteration_bounds = array<i64: 1>, scalar_prefetch = 0 : i64, scratch_operands = 0 : i64, tpu.core_type = #tpu.core_type<tc>, window_params = [{transform_indices = @transform_0, window_bounds = array<i64: 64, 32>}, {transform_indices = @transform_1, window_bounds = array<i64: 64, 1>}, {transform_indices = @transform_2, window_bounds = array<i64: 1, 8, 32>}]} {
    %c0 = arith.constant 0 : index
    %c0_0 = arith.constant 0 : index
    %0 = vector.load %arg1[%c0, %c0_0] : memref<64x32xf32, #tpu.memory_space<vmem>>, vector<64x32xf32>
    %c0_1 = arith.constant 0 : index
    %c0_2 = arith.constant 0 : index
    %1 = vector.load %arg2[%c0_1, %c0_2] : memref<64x1xi32, #tpu.memory_space<vmem>>, vector<64x1xi32>
    %2 = tpu.iota {dimensions = array<i32: 1>} : vector<64x32xi32>
    %3 = vector.broadcast %1 : vector<64x1xi32> to vector<64x32xi32>
    %4 = arith.cmpi eq, %2, %3 : vector<64x32xi32>
    %5 = arith.extui %4 : vector<64x32xi1> to vector<64x32xi32>
    %6 = arith.sitofp %5 : vector<64x32xi32> to vector<64x32xf32>
    %cst = arith.constant 0.939999997 : f32
    %7 = vector.broadcast %cst : f32 to vector<64x32xf32>
    %8 = arith.mulf %6, %7 : vector<64x32xf32>
    %cst_3 = arith.constant 1.875000e-03 : f32
    %9 = vector.broadcast %cst_3 : f32 to vector<64x32xf32>
    %10 = arith.addf %8, %9 : vector<64x32xf32>
    %cst_4 = arith.constant dense<0xFF800000> : vector<64xf32>
    %11 = vector.multi_reduction <maximumf>, %0, %cst_4 [1] : vector<64x32xf32> to vector<64xf32>
    %12 = vector.shape_cast %11 : vector<64xf32> to vector<64x1xf32>
    %13 = vector.broadcast %12 : vector<64x1xf32> to vector<64x32xf32>
    %14 = arith.subf %0, %13 : vector<64x32xf32>
    %15 = math.exp %14 : vector<64x32xf32>
    %cst_5 = arith.constant dense<0.000000e+00> : vector<64xf32>
    %16 = vector.multi_reduction <add>, %15, %cst_5 [1] : vector<64x32xf32> to vector<64xf32>
    %17 = vector.shape_cast %16 : vector<64xf32> to vector<64x1xf32>
    %18 = math.log %17 : vector<64x1xf32>
    %19 = vector.broadcast %18 : vector<64x1xf32> to vector<64x32xf32>
    %20 = arith.subf %14, %19 : vector<64x32xf32>
    %cst_6 = arith.constant 1.000000e+00 : f32
    %21 = vector.broadcast %cst_6 : f32 to vector<64x1xf32>
    %22 = arith.divf %21, %17 : vector<64x1xf32>
    %23 = vector.broadcast %22 : vector<64x1xf32> to vector<64x32xf32>
    %24 = arith.mulf %15, %23 : vector<64x32xf32>
    %cst_7 = arith.constant -16.1180954 : f32
    %cst_8 = arith.constant -1.00000008E-7 : f32
    %25 = vector.broadcast %cst_7 : f32 to vector<64x32xf32>
    %26 = arith.maximumf %25, %20 : vector<64x32xf32>
    %27 = vector.broadcast %cst_8 : f32 to vector<64x32xf32>
    %28 = arith.minimumf %27, %26 : vector<64x32xf32>
    %cst_9 = arith.constant 1.000000e-07 : f32
    %cst_10 = arith.constant 0.99999988 : f32
    %29 = vector.broadcast %cst_9 : f32 to vector<64x32xf32>
    %30 = arith.maximumf %29, %24 : vector<64x32xf32>
    %31 = vector.broadcast %cst_10 : f32 to vector<64x32xf32>
    %32 = arith.minimumf %31, %30 : vector<64x32xf32>
    %cst_11 = arith.constant 0.000000e+00 : f32
    %33 = vector.broadcast %cst_11 : f32 to vector<64x32xf32>
    %34 = arith.subf %33, %10 : vector<64x32xf32>
    %35 = arith.mulf %34, %28 : vector<64x32xf32>
    %cst_12 = arith.constant 1.000000e+00 : f32
    %36 = vector.broadcast %cst_12 : f32 to vector<64x32xf32>
    %37 = arith.subf %36, %32 : vector<64x32xf32>
    %cst_13 = arith.constant 3.000000e-01 : f32
    %38 = vector.broadcast %cst_13 : f32 to vector<64x32xf32>
    %39 = math.powf %37, %38 : vector<64x32xf32>
    %40 = arith.mulf %35, %39 : vector<64x32xf32>
    %c64_i32 = arith.constant 64 : i32
    %41 = arith.muli %arg0, %c64_i32 : i32
    %42 = tpu.iota {dimensions = array<i32: 0>} : vector<64x1xi32>
    %43 = vector.broadcast %41 : i32 to vector<64x1xi32>
    %44 = arith.addi %43, %42 : vector<64x1xi32>
    %c64_i32_14 = arith.constant 64 : i32
    %45 = vector.broadcast %c64_i32_14 : i32 to vector<64x1xi32>
    %46 = arith.cmpi slt, %44, %45 : vector<64x1xi32>
    %cst_15 = arith.constant 0.000000e+00 : f32
    %47 = vector.shape_cast %46 : vector<64x1xi1> to vector<64x1xi1>
    %48 = vector.broadcast %47 : vector<64x1xi1> to vector<64x32xi1>
    %49 = vector.broadcast %cst_15 : f32 to vector<64x32xf32>
    %50 = arith.select %48, %40, %49 : vector<64x32xi1>, vector<64x32xf32>
    %51 = vector.shape_cast %50 : vector<64x32xf32> to vector<8x8x32xf32>
    %cst_16 = arith.constant dense<0.000000e+00> : vector<8x32xf32>
    %52 = vector.multi_reduction <add>, %51, %cst_16 [0] : vector<8x8x32xf32> to vector<8x32xf32>
    %c0_17 = arith.constant 0 : index
    %c0_18 = arith.constant 0 : index
    %c0_19 = arith.constant 0 : index
    %53 = vector.load %arg3[%c0_17, %c0_18, %c0_19] : memref<1x8x32xf32, #tpu.memory_space<vmem>>, vector<1x8x32xf32>
    %54 = vector.shape_cast %53 : vector<1x8x32xf32> to vector<8x32xf32>
    %55 = vector.shape_cast %52 : vector<8x32xf32> to vector<1x8x32xf32>
    tpu.vector_store %arg3[%c0_17, %c0_18, %c0_19], %55 {strides = array<i32>} : memref<1x8x32xf32, #tpu.memory_space<vmem>>, vector<1x8x32xf32>,
    return
  }
  func.func @transform_0(%arg0: i32) -> (i32, i32) {
    %c0_i32 = arith.constant 0 : i32
    %c0_i32_0 = arith.constant 0 : i32
    return %arg0, %c0_i32 : i32, i32
  }
  func.func @transform_1(%arg0: i32) -> (i32, i32) {
    %c0_i32 = arith.constant 0 : i32
    %c0_i32_0 = arith.constant 0 : i32
    return %arg0, %c0_i32 : i32, i32
  }
  func.func @transform_2(%arg0: i32) -> (i32, i32, i32) {
    %c0_i32 = arith.constant 0 : i32
    %c0_i32_0 = arith.constant 0 : i32
    %c0_i32_1 = arith.constant 0 : i32
    return %arg0, %c0_i32, %c0_i32_0 : i32, i32, i32
  }
}

</mosaic_0001>

<llo_original>
// kernel: tpu_custom_call.1
$region0: #{tpu_custom_call.1}
  #allocation0 [shape = 'u32[]', space=smem, size = 0x4, offset = 0x4, fixed_abs, tag = 'smem constant byte address 0x4 - core index']
  #allocation1 [shape = 'u32[144,128]{1,0:T(1,128)}', space=vmem, size = 0x12000, scoped, tag = 'internal scratch']
  %s0 = inlined_call_operand.vmem [shape: f32[64,32], index: 0, kind: input, shape index: {}]
  %s1 = inlined_call_operand.vmem [shape: s32[64,1], index: 1, kind: input, shape index: {}]
  %s2 = inlined_call_operand.hbm [shape: f32[1,8,32], index: 2, kind: output, shape index: {}]
  %s3 = sld [smem:[#allocation0]]
  $region18: #{tpu_custom_call.1} parent=0
    _
  %s5 = ssub.s32 1, %s3
  %s6 = scalar_select 0, %s5, %s3
  $region1: #{tpu_custom_call.1} parent=0
    #allocation2 [shape = 'u8[4096]{0}', space=vmem, size = 0x1000, scoped, tag = 'output window, operand 0, single buffered']
    #allocation3 [shape = 's32[1]{0}', space=sflag, size = 0x4, scoped, tag = 'scoped memory for tpu_custom_call.1']
    %7 = vsyncpa [#allocation3], 0
    // Predicated region
    $region2: #{tpu_custom_call.1} parent=1 // pred_check
      _
    $region3: #{tpu_custom_call.1} parent=1 // pred_check_branch
      %9 = sbr.rel (0) target = $region5
    $region4: #{tpu_custom_call.1} parent=1 // pred_region
      _
    $region5: #{tpu_custom_call.1} parent=1 // pred_fallthru
      _
    // Predicated region
    $region6: #{tpu_custom_call.1} parent=1 // pred_check
      _
    $region7: #{tpu_custom_call.1} parent=1 // pred_check_branch
      %11 = sbr.rel (0) target = $region9
    $region8: #{tpu_custom_call.1} parent=1 // pred_region
      _
    $region9: #{tpu_custom_call.1} parent=1 // pred_fallthru
      _
    %v12 = vld [vmem:[%s0] sm:$0xff]
    %v13 = vld [vmem:[%s0 + $0x8] sm:$0xff]
    %v14 = vld [vmem:[%s0 + $0x10] sm:$0xff]
    %v15 = vld [vmem:[%s0 + $0x18] sm:$0xff]
    %v16 = vld [vmem:[%s0 + $0x20] sm:$0xff]
    %v17 = vld [vmem:[%s0 + $0x28] sm:$0xff]
    %v18 = vld [vmem:[%s0 + $0x30] sm:$0xff]
    %v19 = vld [vmem:[%s0 + $0x38] sm:$0xff]
    %v20 = vld [vmem:[%s1] sm:$0xff]
    %v21 = vld [vmem:[%s1 + $0x8] sm:$0xff]
    %v22 = vld [vmem:[%s1 + $0x10] sm:$0xff]
    %v23 = vld [vmem:[%s1 + $0x18] sm:$0xff]
    %v24 = vld [vmem:[%s1 + $0x20] sm:$0xff]
    %v25 = vld [vmem:[%s1 + $0x28] sm:$0xff]
    %v26 = vld [vmem:[%s1 + $0x30] sm:$0xff]
    %v27 = vld [vmem:[%s1 + $0x38] sm:$0xff]
    %v28 = vlaneseq
    %v29 = vand.u32 %v28, 127
    %30 = vset.pattern.permute.xlu0 0
    %31 = vperm.xlu0 %30, %v20
    %v32 = vpop.permute.xlu0 %31
    %33 = vset.pattern.permute.xlu0 0
    %34 = vperm.xlu0 %33, %v21
    %v35 = vpop.permute.xlu0 %34
    %36 = vset.pattern.permute.xlu0 0
    %37 = vperm.xlu0 %36, %v22
    %v38 = vpop.permute.xlu0 %37
    %39 = vset.pattern.permute.xlu0 0
    %40 = vperm.xlu0 %39, %v23
    %v41 = vpop.permute.xlu0 %40
    %42 = vset.pattern.permute.xlu0 0
    %43 = vperm.xlu0 %42, %v24
    %v44 = vpop.permute.xlu0 %43
    %45 = vset.pattern.permute.xlu0 0
    %46 = vperm.xlu0 %45, %v25
    %v47 = vpop.permute.xlu0 %46
    %48 = vset.pattern.permute.xlu0 0
    %49 = vperm.xlu0 %48, %v26
    %v50 = vpop.permute.xlu0 %49
    %51 = vset.pattern.permute.xlu0 0
    %52 = vperm.xlu0 %51, %v27
    %v53 = vpop.permute.xlu0 %52
    %vm54 = vcmp.eq.s32.totalorder %v29, %v32
    %vm55 = vcmp.eq.s32.totalorder %v29, %v35
    %vm56 = vcmp.eq.s32.totalorder %v29, %v38
    %vm57 = vcmp.eq.s32.totalorder %v29, %v41
    %vm58 = vcmp.eq.s32.totalorder %v29, %v44
    %vm59 = vcmp.eq.s32.totalorder %v29, %v47
    %vm60 = vcmp.eq.s32.totalorder %v29, %v50
    %vm61 = vcmp.eq.s32.totalorder %v29, %v53
    %v62 = vsel %vm54, 1, 0
    %v63 = vsel %vm55, 1, 0
    %v64 = vsel %vm56, 1, 0
    %v65 = vsel %vm57, 1, 0
    %v66 = vsel %vm58, 1, 0
    %v67 = vsel %vm59, 1, 0
    %v68 = vsel %vm60, 1, 0
    %v69 = vsel %vm61, 1, 0
    %v70 = vcvt.s32.f32 %v62
    %v71 = vcvt.s32.f32 %v63
    %v72 = vcvt.s32.f32 %v64
    %v73 = vcvt.s32.f32 %v65
    %v74 = vcvt.s32.f32 %v66
    %v75 = vcvt.s32.f32 %v67
    %v76 = vcvt.s32.f32 %v68
    %v77 = vcvt.s32.f32 %v69
    %v78 = vmul.f32 %v70, 0.94
    %v79 = vmul.f32 %v71, 0.94
    %v80 = vmul.f32 %v72, 0.94
    %v81 = vmul.f32 %v73, 0.94
    %v82 = vmul.f32 %v74, 0.94
    %v83 = vmul.f32 %v75, 0.94
    %v84 = vmul.f32 %v76, 0.94
    %v85 = vmul.f32 %v77, 0.94
    %v86 = vadd.f32 %v78, 0.001875
    %v87 = vadd.f32 %v79, 0.001875
    %v88 = vadd.f32 %v80, 0.001875
    %v89 = vadd.f32 %v81, 0.001875
    %v90 = vadd.f32 %v82, 0.001875
    %v91 = vadd.f32 %v83, 0.001875
    %v92 = vadd.f32 %v84, 0.001875
    %v93 = vadd.f32 %v85, 0.001875
    %vm94 = vcmask 261120
    %v95 = vsel %vm94, %v12, -inf
    %96 = vmax.xlane.f32.xlu0 %v95
    %v97 = vpop.xlane.xlu0 %96
    %v98 = vsel %vm94, %v13, -inf
    %99 = vmax.xlane.f32.xlu0 %v98
    %v100 = vpop.xlane.xlu0 %99
    %v101 = vsel %vm94, %v14, -inf
    %102 = vmax.xlane.f32.xlu0 %v101
    %v103 = vpop.xlane.xlu0 %102
    %v104 = vsel %vm94, %v15, -inf
    %105 = vmax.xlane.f32.xlu0 %v104
    %v106 = vpop.xlane.xlu0 %105
    %v107 = vsel %vm94, %v16, -inf
    %108 = vmax.xlane.f32.xlu0 %v107
    %v109 = vpop.xlane.xlu0 %108
    %v110 = vsel %vm94, %v17, -inf
    %111 = vmax.xlane.f32.xlu0 %v110
    %v112 = vpop.xlane.xlu0 %111
    %v113 = vsel %vm94, %v18, -inf
    %114 = vmax.xlane.f32.xlu0 %v113
    %v115 = vpop.xlane.xlu0 %114
    %v116 = vsel %vm94, %v19, -inf
    %117 = vmax.xlane.f32.xlu0 %v116
    %v118 = vpop.xlane.xlu0 %117
    %v119 = vsub.f32 %v12, %v97
    %v120 = vsub.f32 %v13, %v100
    %v121 = vsub.f32 %v14, %v103
    %v122 = vsub.f32 %v15, %v106
    %v123 = vsub.f32 %v16, %v109
    %v124 = vsub.f32 %v17, %v112
    %v125 = vsub.f32 %v18, %v115
    %v126 = vsub.f32 %v19, %v118
    %v127 = vmul.f32 %v119, 1.442695
    %v128 = vpow.pop %v127
    %v129 = vmul.f32 %v120, 1.442695
    %v130 = vpow.pop %v129
    %v131 = vmul.f32 %v121, 1.442695
    %v132 = vpow.pop %v131
    %v133 = vmul.f32 %v122, 1.442695
    %v134 = vpow.pop %v133
    %v135 = vmul.f32 %v123, 1.442695
    %v136 = vpow.pop %v135
    %v137 = vmul.f32 %v124, 1.442695
    %v138 = vpow.pop %v137
    %v139 = vmul.f32 %v125, 1.442695
    %v140 = vpow.pop %v139
    %v141 = vmul.f32 %v126, 1.442695
    %v142 = vpow.pop %v141
    %v143 = vsel %vm94, %v128, 0.0
    %144 = vadd.xlane.f32.xlu0 %v143
    %v145 = vpop.xlane.xlu0 %144
    %v146 = vsel %vm94, %v130, 0.0
    %147 = vadd.xlane.f32.xlu0 %v146
    %v148 = vpop.xlane.xlu0 %147
    %v149 = vsel %vm94, %v132, 0.0
    %150 = vadd.xlane.f32.xlu0 %v149
    %v151 = vpop.xlane.xlu0 %150
    %v152 = vsel %vm94, %v134, 0.0
    %153 = vadd.xlane.f32.xlu0 %v152
    %v154 = vpop.xlane.xlu0 %153
    %v155 = vsel %vm94, %v136, 0.0
    %156 = vadd.xlane.f32.xlu0 %v155
    %v157 = vpop.xlane.xlu0 %156
    %v158 = vsel %vm94, %v138, 0.0
    %159 = vadd.xlane.f32.xlu0 %v158
    %v160 = vpop.xlane.xlu0 %159
    %v161 = vsel %vm94, %v140, 0.0
    %162 = vadd.xlane.f32.xlu0 %v161
    %v163 = vpop.xlane.xlu0 %162
    %v164 = vsel %vm94, %v142, 0.0
    %165 = vadd.xlane.f32.xlu0 %v164
    %v166 = vpop.xlane.xlu0 %165
    %v167 = vlog2.pop %v145
    %v168 = vmul.f32 %v167, 0.6931472
    %v169 = vlog2.pop %v148
    %v170 = vmul.f32 %v169, 0.6931472
    %v171 = vlog2.pop %v151
    %v172 = vmul.f32 %v171, 0.6931472
    %v173 = vlog2.pop %v154
    %v174 = vmul.f32 %v173, 0.6931472
    %v175 = vlog2.pop %v157
    %v176 = vmul.f32 %v175, 0.6931472
    %v177 = vlog2.pop %v160
    %v178 = vmul.f32 %v177, 0.6931472
    %v179 = vlog2.pop %v163
    %v180 = vmul.f32 %v179, 0.6931472
    %v181 = vlog2.pop %v166
    %v182 = vmul.f32 %v181, 0.6931472
    %v183 = vsub.f32 %v119, %v168
    %v184 = vsub.f32 %v120, %v170
    %v185 = vsub.f32 %v121, %v172
    %v186 = vsub.f32 %v122, %v174
    %v187 = vsub.f32 %v123, %v176
    %v188 = vsub.f32 %v124, %v178
    %v189 = vsub.f32 %v125, %v180
    %v190 = vsub.f32 %v126, %v182
    %v191 = vrcp.pop %v145
    %v192 = vmul.f32 1.0, %v191
    %v193 = vrcp.pop %v148
    %v194 = vmul.f32 1.0, %v193
    %v195 = vrcp.pop %v151
    %v196 = vmul.f32 1.0, %v195
    %v197 = vrcp.pop %v154
    %v198 = vmul.f32 1.0, %v197
    %v199 = vrcp.pop %v157
    %v200 = vmul.f32 1.0, %v199
    %v201 = vrcp.pop %v160
    %v202 = vmul.f32 1.0, %v201
    %v203 = vrcp.pop %v163
    %v204 = vmul.f32 1.0, %v203
    %v205 = vrcp.pop %v166
    %v206 = vmul.f32 1.0, %v205
    %v207 = vmul.f32 %v128, %v192
    %v208 = vmul.f32 %v130, %v194
    %v209 = vmul.f32 %v132, %v196
    %v210 = vmul.f32 %v134, %v198
    %v211 = vmul.f32 %v136, %v200
    %v212 = vmul.f32 %v138, %v202
    %v213 = vmul.f32 %v140, %v204
    %v214 = vmul.f32 %v142, %v206
    %v215 = vmax.f32 %v183, -16.118095
    %v216 = vmax.f32 %v184, -16.118095
    %v217 = vmax.f32 %v185, -16.118095
    %v218 = vmax.f32 %v186, -16.118095
    %v219 = vmax.f32 %v187, -16.118095
    %v220 = vmax.f32 %v188, -16.118095
    %v221 = vmax.f32 %v189, -16.118095
    %v222 = vmax.f32 %v190, -16.118095
    %v223 = vmin.f32 %v215, -1.0000001e-07
    %v224 = vmin.f32 %v216, -1.0000001e-07
    %v225 = vmin.f32 %v217, -1.0000001e-07
    %v226 = vmin.f32 %v218, -1.0000001e-07
    %v227 = vmin.f32 %v219, -1.0000001e-07
    %v228 = vmin.f32 %v220, -1.0000001e-07
    %v229 = vmin.f32 %v221, -1.0000001e-07
    %v230 = vmin.f32 %v222, -1.0000001e-07
    %v231 = vmax.f32 %v207, 1e-07
    %v232 = vmax.f32 %v208, 1e-07
    %v233 = vmax.f32 %v209, 1e-07
    %v234 = vmax.f32 %v210, 1e-07
    %v235 = vmax.f32 %v211, 1e-07
    %v236 = vmax.f32 %v212, 1e-07
    %v237 = vmax.f32 %v213, 1e-07
    %v238 = vmax.f32 %v214, 1e-07
    %v239 = vmin.f32 %v231, 0.9999999
    %v240 = vmin.f32 %v232, 0.9999999
    %v241 = vmin.f32 %v233, 0.9999999
    %v242 = vmin.f32 %v234, 0.9999999
    %v243 = vmin.f32 %v235, 0.9999999
    %v244 = vmin.f32 %v236, 0.9999999
    %v245 = vmin.f32 %v237, 0.9999999
    %v246 = vmin.f32 %v238, 0.9999999
    %v247 = vsub.f32 0.0, %v86
    %v248 = vsub.f32 0.0, %v87
    %v249 = vsub.f32 0.0, %v88
    %v250 = vsub.f32 0.0, %v89
    %v251 = vsub.f32 0.0, %v90
    %v252 = vsub.f32 0.0, %v91
    %v253 = vsub.f32 0.0, %v92
    %v254 = vsub.f32 0.0, %v93
    %v255 = vmul.f32 %v247, %v223
    %v256 = vmul.f32 %v248, %v224
    %v257 = vmul.f32 %v249, %v225
    %v258 = vmul.f32 %v250, %v226
    %v259 = vmul.f32 %v251, %v227
    %v260 = vmul.f32 %v252, %v228
    %v261 = vmul.f32 %v253, %v229
    %v262 = vmul.f32 %v254, %v230
    %v263 = vsub.f32 1.0, %v239
    %v264 = vsub.f32 1.0, %v240
    %v265 = vsub.f32 1.0, %v241
    %v266 = vsub.f32 1.0, %v242
    %v267 = vsub.f32 1.0, %v243
    %v268 = vsub.f32 1.0, %v244
    %v269 = vsub.f32 1.0, %v245
    %v270 = vsub.f32 1.0, %v246
    %v271 = vpow.f32 %v263, 0.3
    %v272 = vpow.f32 %v264, 0.3
    %v273 = vpow.f32 %v265, 0.3
    %v274 = vpow.f32 %v266, 0.3
    %v275 = vpow.f32 %v267, 0.3
    %v276 = vpow.f32 %v268, 0.3
    %v277 = vpow.f32 %v269, 0.3
    %v278 = vpow.f32 %v270, 0.3
    %v279 = vmul.f32 %v255, %v271
    %v280 = vmul.f32 %v256, %v272
    %v281 = vmul.f32 %v257, %v273
    %v282 = vmul.f32 %v258, %v274
    %v283 = vmul.f32 %v259, %v275
    %v284 = vmul.f32 %v260, %v276
    %v285 = vmul.f32 %v261, %v277
    %v286 = vmul.f32 %v262, %v278
    %s287 = smul.u32 0, 64
    %v288 = vlaneseq
    %v289 = vshrl.u32 %v288, 7
    %v290 = vadd.s32 %v289, 8
    %v291 = vadd.s32 %v289, 16
    %v292 = vadd.s32 %v289, 24
    %v293 = vadd.s32 %v289, 32
    %v294 = vadd.s32 %v289, 40
    %v295 = vadd.s32 %v289, 48
    %v296 = vadd.s32 %v289, 56
    %v297 = vstv %s287
    %v298 = vadd.s32 %v297, %v289
    %v299 = vadd.s32 %v297, %v290
    %v300 = vadd.s32 %v297, %v291
    %v301 = vadd.s32 %v297, %v292
    %v302 = vadd.s32 %v297, %v293
    %v303 = vadd.s32 %v297, %v294
    %v304 = vadd.s32 %v297, %v295
    %v305 = vadd.s32 %v297, %v296
    %vm306 = vcmp.lt.s32.totalorder %v298, 64
    %vm307 = vcmp.lt.s32.totalorder %v299, 64
    %vm308 = vcmp.lt.s32.totalorder %v300, 64
    %vm309 = vcmp.lt.s32.totalorder %v301, 64
    %vm310 = vcmp.lt.s32.totalorder %v302, 64
    %vm311 = vcmp.lt.s32.totalorder %v303, 64
    %vm312 = vcmp.lt.s32.totalorder %v304, 64
    %vm313 = vcmp.lt.s32.totalorder %v305, 64
    %v314 = vsel %vm306, 1, 0
    %v315 = vsel %vm307, 1, 0
    %v316 = vsel %vm308, 1, 0
    %v317 = vsel %vm309, 1, 0
    %v318 = vsel %vm310, 1, 0
    %v319 = vsel %vm311, 1, 0
    %v320 = vsel %vm312, 1, 0
    %v321 = vsel %vm313, 1, 0
    %vm322 = vcmp.eq.s32.totalorder %v314, 1
    %vm323 = vcmp.eq.s32.totalorder %v315, 1
    %vm324 = vcmp.eq.s32.totalorder %v316, 1
    %vm325 = vcmp.eq.s32.totalorder %v317, 1
    %vm326 = vcmp.eq.s32.totalorder %v318, 1
    %vm327 = vcmp.eq.s32.totalorder %v319, 1
    %vm328 = vcmp.eq.s32.totalorder %v320, 1
    %vm329 = vcmp.eq.s32.totalorder %v321, 1
    %v330 = vsel %vm322, %v279, 0.0
    %v331 = vsel %vm323, %v280, 0.0
    %v332 = vsel %vm324, %v281, 0.0
    %v333 = vsel %vm325, %v282, 0.0
    %v334 = vsel %vm326, %v283, 0.0
    %v335 = vsel %vm327, %v284, 0.0
    %v336 = vsel %vm328, %v285, 0.0
    %v337 = vsel %vm329, %v286, 0.0
    %v338 = vsel %vm94, %v330, 0.0
    %v339 = vsel %vm94, %v331, 0.0
    %v340 = vadd.f32 %v338, %v339
    %v341 = vsel %vm94, %v332, 0.0
    %v342 = vadd.f32 %v340, %v341
    %v343 = vsel %vm94, %v333, 0.0
    %v344 = vadd.f32 %v342, %v343
    %v345 = vsel %vm94, %v334, 0.0
    %v346 = vadd.f32 %v344, %v345
    %v347 = vsel %vm94, %v335, 0.0
    %v348 = vadd.f32 %v346, %v347
    %v349 = vsel %vm94, %v336, 0.0
    %v350 = vadd.f32 %v348, %v349
    %v351 = vsel %vm94, %v337, 0.0
    %v352 = vadd.f32 %v350, %v351
    %353 = vst.msk [vmem:[#allocation2] sm:$0xff] %vm94, %v352
    // Predicated region
    $region10: #{tpu_custom_call.1} parent=1 // pred_check
      _
    $region11: #{tpu_custom_call.1} parent=1 // pred_check_branch
      %355 = sbr.rel (0) target = $region13
    $region12: #{tpu_custom_call.1} parent=1 // pred_region
      %s357 = ssub.s32 128, 128
      %358 = vsyncadd [#allocation3], %s357
      %s360 = sshll.u32 [#allocation2], 4
      %s361 = int_to_ptr.vmem [resolvable:$true] %s360
      %363 = dma.vmem_to_hbm [thread:$0]  %s361, 128, %s2, [#allocation3]
    $region13: #{tpu_custom_call.1} parent=1 // pred_fallthru
      _
    // Predicated region
    $region14: #{tpu_custom_call.1} parent=1 // pred_check
      _
    $region15: #{tpu_custom_call.1} parent=1 // pred_check_branch
      %365 = sbr.rel (0) target = $region17
    $region16: #{tpu_custom_call.1} parent=1 // pred_region
      %366 = dma.done [#allocation3], 128
    $region17: #{tpu_custom_call.1} parent=1 // pred_fallthru
      _
    %367 = vsyncpa [#allocation3], 1

</llo_original>
